<compile_context>
chip_gen: v7x
topology: tpu7x:2x2x1
jax: 0.10.0
libtpu: 0.0.40
codegen_flags: <defaults>
</compile_context>

<pallas_src>
import functools

import jax
import jax.numpy as jnp
from jax.experimental import pallas as pl
from jax.experimental.pallas import tpu as pltpu


def mlp_kernel(x_ref, wd_ref, b_ref, wu_ref, o_ref, acc_ref):
    # x_ref:   (tm, d_model)
    # wd_ref:  (d_model, tk)   tk-wide slice of W_down
    # b_ref:   (1, tk)         matching bias slice (f32)
    # wu_ref:  (tk, d_model)   matching slice of W_up
    # o_ref:   (tm, d_model)
    # acc_ref: (tm, d_model)   f32 partial-output accumulator
    k = pl.program_id(1)

    @pl.when(k == 0)
    def _init():
        acc_ref[...] = jnp.zeros_like(acc_ref)

    # Down-projection for this hidden slice (f32 accumulation on the MXU).
    h = jnp.dot(x_ref[...], wd_ref[...], preferred_element_type=jnp.float32)
    # Bias + ReLU (cfg.act_fn = nn.ReLU), computed in f32.
    h = jnp.maximum(h + b_ref[...], 0.0)
    # Up-projection of this slice; accumulate the partial output in f32.
    acc_ref[...] += jnp.dot(h.astype(wu_ref.dtype), wu_ref[...],
                            preferred_element_type=jnp.float32)

    @pl.when(k == pl.num_programs(1) - 1)
    def _finalize():
        o_ref[...] = acc_ref[...].astype(o_ref.dtype)


def _round_up(n, m):
    return ((n + m - 1) // m) * m


@functools.partial(jax.jit, static_argnames=("tm", "tk", "compute_dtype"))
def mlp_forward(x, w_down, b, w_up, *, tm=256, tk=512, compute_dtype=None):
    """Fused relu(x @ w_down + b) @ w_up.  x: (..., d_model) -> (..., d_model).

    tm: row tile over the flattened batch*seq rows (MXU-filling; multiple of 8).
    tk: hidden (d_mlp) tile; the hidden dim is a reduction grid axis.
    compute_dtype: optional MXU input dtype (e.g. jnp.bfloat16); accumulation
        stays f32 and the output keeps x.dtype.
    """
    d_model, d_mlp = w_down.shape
    assert w_up.shape == (d_mlp, d_model)
    orig_shape = x.shape
    out_dtype = x.dtype

    x2d = x.reshape(-1, d_model)
    m = x2d.shape[0]

    # ---- tile sizing -----------------------------------------------------
    # Row tile: as large as requested but never bigger than the (8-aligned)
    # problem; always a multiple of 8 (sublane).  256 feeds both the 4x128x128
    # (v5e) and 2x256x256 (v6e/v7x) MXUs.
    tm = max(8, min(tm, _round_up(m, 8)))
    tm = _round_up(tm, 8)
    # Hidden tile: multiple of 128 that divides d_mlp, else keep d_mlp whole.
    if tk >= d_mlp or tk % 128 != 0 or d_mlp % tk != 0:
        tk = d_mlp
    num_k = d_mlp // tk

    # Ragged tail: pad the flattened rows up to a multiple of tm (padded rows
    # are discarded after the call).
    m_pad = _round_up(m, tm)
    if m_pad != m:
        x2d = jnp.pad(x2d, ((0, m_pad - m), (0, 0)))

    # Optional low-precision MXU inputs (f32 accumulation stays in-kernel).
    if compute_dtype is not None:
        x2d = x2d.astype(compute_dtype)
        w_down = w_down.astype(compute_dtype)
        w_up = w_up.astype(compute_dtype)
    b2d = b.reshape(1, d_mlp).astype(jnp.float32)

    # Weights whose block index never changes (num_k == 1) are resident:
    # single-buffer them so VMEM does not pay for a useless second copy.
    weight_mode = pl.Buffered(1) if num_k == 1 else None

    in_isz = jnp.dtype(x2d.dtype).itemsize
    out_isz = jnp.dtype(out_dtype).itemsize
    nbuf_w = 1 if num_k == 1 else 2
    vmem_est = (2 * tm * d_model * in_isz            # x tiles (double-buffered)
                + nbuf_w * d_model * tk * in_isz     # W_down tiles
                + nbuf_w * tk * 4                    # bias tiles
                + nbuf_w * tk * d_model * in_isz     # W_up tiles
                + 2 * tm * d_model * out_isz         # out tiles
                + tm * d_model * 4                   # f32 accumulator scratch
                + tm * tk * 4)                       # hidden activation
    vmem_limit = int(min(128 * 1024 * 1024, max(32 * 1024 * 1024, 1.5 * vmem_est)))

    cost = pl.CostEstimate(
        flops=4 * m_pad * d_model * d_mlp,
        transcendentals=0,
        bytes_accessed=(m_pad * d_model * (in_isz + out_isz)
                        + 2 * d_model * d_mlp * in_isz + d_mlp * 4),
    )

    grid = (m_pad // tm, num_k)

    out = pl.pallas_call(
        mlp_kernel,
        out_shape=jax.ShapeDtypeStruct((m_pad, d_model), out_dtype),
        grid_spec=pltpu.PrefetchScalarGridSpec(
            num_scalar_prefetch=0,
            grid=grid,
            in_specs=[
                pl.BlockSpec((tm, d_model), lambda i, k: (i, 0)),      # x rows
                pl.BlockSpec((d_model, tk), lambda i, k: (0, k),       # W_down
                             pipeline_mode=weight_mode),
                pl.BlockSpec((1, tk), lambda i, k: (0, k),             # bias
                             pipeline_mode=weight_mode),
                pl.BlockSpec((tk, d_model), lambda i, k: (k, 0),       # W_up
                             pipeline_mode=weight_mode),
            ],
            out_specs=pl.BlockSpec((tm, d_model), lambda i, k: (i, 0)),
            scratch_shapes=[pltpu.VMEM((tm, d_model), jnp.float32)],
        ),
        compiler_params=pltpu.CompilerParams(
            dimension_semantics=("parallel", "arbitrary"),
            vmem_limit_bytes=vmem_limit),
        cost_estimate=cost,
    )(x2d, w_down, b2d, w_up)

    if m_pad != m:
        out = out[:m]
    return out.reshape(orig_shape)


if __name__ == "__main__":
    # GPTConfig defaults relevant here: d_model=128, d_mlp=512, act_fn=ReLU.
    d_model, d_mlp = 128, 512
    batch, seq = 2, 8

    key = jax.random.PRNGKey(0)
    k_x, k_wd, k_wu, k_x2 = jax.random.split(key, 4)

    # Deterministic parameter init mirroring the PyTorch __init__ scalings.
    W_m_down = jax.random.normal(k_wd, (d_model, d_mlp), jnp.float32) * (d_model ** -0.5)
    W_m_up = jax.random.normal(k_wu, (d_mlp, d_model), jnp.float32) * (d_mlp ** -0.5)
    B = jnp.zeros((d_mlp,), jnp.float32)

    x = jax.random.normal(k_x, (batch, seq, d_model), jnp.float32)
    ref = jnp.maximum(x @ W_m_down + B, 0.0) @ W_m_up

    # 1) f32, whole hidden dim in one tile (resident, single-buffered weights).
    out1 = jax.block_until_ready(mlp_forward(x, W_m_down, B, W_m_up))
    assert out1.shape == (batch, seq, d_model)
    assert jnp.allclose(out1, ref, atol=1e-4, rtol=1e-4)

    # 2) f32, hidden dim tiled (tk=256 -> 2-step reduction with accumulator).
    out2 = jax.block_until_ready(mlp_forward(x, W_m_down, B, W_m_up, tk=256))
    assert jnp.allclose(out2, ref, atol=1e-4, rtol=1e-4)

    # 3) bf16 MXU inputs with f32 accumulation (v6e/v7x fast path).
    out3 = jax.block_until_ready(
        mlp_forward(x, W_m_down, B, W_m_up, compute_dtype=jnp.bfloat16))
    assert out3.dtype == x.dtype
    assert jnp.allclose(out3, ref, atol=5e-2, rtol=5e-2)

    # 4) ragged row count + multiple row tiles + hidden tiling (pads to tm).
    x_big = jax.random.normal(k_x2, (3, 37, d_model), jnp.float32)
    ref_big = jnp.maximum(x_big @ W_m_down + B, 0.0) @ W_m_up
    out4 = jax.block_until_ready(
        mlp_forward(x_big, W_m_down, B, W_m_up, tm=64, tk=256))
    assert out4.shape == x_big.shape
    assert jnp.allclose(out4, ref_big, atol=1e-4, rtol=1e-4)

    print("KERNEL_OK")
</pallas_src>

<mosaic_0001>
module attributes {stable_mosaic.version = 11 : i64} {
  func.func @mlp_kernel(%arg0: i32, %arg1: i32, %arg2: memref<16x128xf32, #tpu.memory_space<vmem>>, %arg3: memref<128x512xf32, #tpu.memory_space<vmem>>, %arg4: memref<1x512xf32, #tpu.memory_space<vmem>>, %arg5: memref<512x128xf32, #tpu.memory_space<vmem>>, %arg6: memref<16x128xf32, #tpu.memory_space<vmem>>, %arg7: memref<16x128xf32, #tpu.memory_space<vmem>>) attributes {dimension_semantics = [#tpu.dimension_semantics<parallel>, #tpu.dimension_semantics<arbitrary>], iteration_bounds = array<i64: 1, 1>, scalar_prefetch = 0 : i64, scratch_operands = 1 : i64, tpu.core_type = #tpu.core_type<tc>, window_params = [{transform_indices = @transform_0, window_bounds = array<i64: 16, 128>}, {pipeline_mode = #tpu.pipeline_mode<synchronous>, transform_indices = @transform_1, window_bounds = array<i64: 128, 512>}, {pipeline_mode = #tpu.pipeline_mode<synchronous>, transform_indices = @transform_2, window_bounds = array<i64: 1, 512>}, {pipeline_mode = #tpu.pipeline_mode<synchronous>, transform_indices = @transform_3, window_bounds = array<i64: 512, 128>}, {transform_indices = @transform_4, window_bounds = array<i64: 16, 128>}]} {
    %c0_i32 = arith.constant 0 : i32
    %0 = arith.cmpi eq, %arg1, %c0_i32 : i32
    %1 = arith.extui %0 : i1 to i32
    %c0_i32_0 = arith.constant 0 : i32
    %2 = arith.cmpi ne, %1, %c0_i32_0 : i32
    scf.if %2 {
      %cst_16 = arith.constant 0.000000e+00 : f32
      %19 = vector.broadcast %cst_16 : f32 to vector<16x128xf32>
      %c0_17 = arith.constant 0 : index
      %c0_18 = arith.constant 0 : index
      %20 = vector.load %arg7[%c0_17, %c0_18] : memref<16x128xf32, #tpu.memory_space<vmem>>, vector<16x128xf32>
      tpu.vector_store %arg7[%c0_17, %c0_18], %19 {strides = array<i32>} : memref<16x128xf32, #tpu.memory_space<vmem>>, vector<16x128xf32>,
    } else {
    }
    %c0 = arith.constant 0 : index
    %c0_1 = arith.constant 0 : index
    %3 = vector.load %arg2[%c0, %c0_1] : memref<16x128xf32, #tpu.memory_space<vmem>>, vector<16x128xf32>
    %c0_2 = arith.constant 0 : index
    %c0_3 = arith.constant 0 : index
    %4 = vector.load %arg3[%c0_2, %c0_3] : memref<128x512xf32, #tpu.memory_space<vmem>>, vector<128x512xf32>
    %cst = arith.constant dense<0.000000e+00> : vector<16x512xf32>
    %5 = tpu.matmul %3, %4, %cst {dimension_numbers = #tpu.dot_dimension_numbers<[1], [0], [0], [1], [0, 0, 1, 1], [], []>} : vector<16x128xf32>, vector<128x512xf32>, vector<16x512xf32> -> vector<16x512xf32>
    %c0_4 = arith.constant 0 : index
    %c0_5 = arith.constant 0 : index
    %6 = vector.load %arg4[%c0_4, %c0_5] : memref<1x512xf32, #tpu.memory_space<vmem>>, vector<1x512xf32>
    %7 = vector.broadcast %6 : vector<1x512xf32> to vector<16x512xf32>
    %8 = arith.addf %5, %7 : vector<16x512xf32>
    %cst_6 = arith.constant 0.000000e+00 : f32
    %9 = vector.broadcast %cst_6 : f32 to vector<16x512xf32>
    %10 = arith.maximumf %8, %9 : vector<16x512xf32>
    %c0_7 = arith.constant 0 : index
    %c0_8 = arith.constant 0 : index
    %11 = vector.load %arg7[%c0_7, %c0_8] : memref<16x128xf32, #tpu.memory_space<vmem>>, vector<16x128xf32>
    %c0_9 = arith.constant 0 : index
    %c0_10 = arith.constant 0 : index
    %12 = vector.load %arg5[%c0_9, %c0_10] : memref<512x128xf32, #tpu.memory_space<vmem>>, vector<512x128xf32>
    %cst_11 = arith.constant dense<0.000000e+00> : vector<16x128xf32>
    %13 = tpu.matmul %10, %12, %cst_11 {dimension_numbers = #tpu.dot_dimension_numbers<[1], [0], [0], [1], [0, 0, 1, 1], [], []>} : vector<16x512xf32>, vector<512x128xf32>, vector<16x128xf32> -> vector<16x128xf32>
    %14 = arith.addf %11, %13 : vector<16x128xf32>
    %c0_12 = arith.constant 0 : index
    %c0_13 = arith.constant 0 : index
    %15 = vector.load %arg7[%c0_12, %c0_13] : memref<16x128xf32, #tpu.memory_space<vmem>>, vector<16x128xf32>
    tpu.vector_store %arg7[%c0_12, %c0_13], %14 {strides = array<i32>} : memref<16x128xf32, #tpu.memory_space<vmem>>, vector<16x128xf32>,
    %c0_i32_14 = arith.constant 0 : i32
    %16 = arith.cmpi eq, %arg1, %c0_i32_14 : i32
    %17 = arith.extui %16 : i1 to i32
    %c0_i32_15 = arith.constant 0 : i32
    %18 = arith.cmpi ne, %17, %c0_i32_15 : i32
    scf.if %18 {
      %c0_16 = arith.constant 0 : index
      %c0_17 = arith.constant 0 : index
      %19 = vector.load %arg7[%c0_16, %c0_17] : memref<16x128xf32, #tpu.memory_space<vmem>>, vector<16x128xf32>
      %c0_18 = arith.constant 0 : index
      %c0_19 = arith.constant 0 : index
      %20 = vector.load %arg6[%c0_18, %c0_19] : memref<16x128xf32, #tpu.memory_space<vmem>>, vector<16x128xf32>
      tpu.vector_store %arg6[%c0_18, %c0_19], %19 {strides = array<i32>} : memref<16x128xf32, #tpu.memory_space<vmem>>, vector<16x128xf32>,
    } else {
    }
    return
  }
  func.func @transform_0(%arg0: i32, %arg1: i32) -> (i32, i32) {
    %c0_i32 = arith.constant 0 : i32
    %c0_i32_0 = arith.constant 0 : i32
    return %arg0, %c0_i32 : i32, i32
  }
  func.func @transform_1(%arg0: i32, %arg1: i32) -> (i32, i32) {
    %c0_i32 = arith.constant 0 : i32
    %c0_i32_0 = arith.constant 0 : i32
    return %c0_i32, %arg1 : i32, i32
  }
  func.func @transform_2(%arg0: i32, %arg1: i32) -> (i32, i32) {
    %c0_i32 = arith.constant 0 : i32
    %c0_i32_0 = arith.constant 0 : i32
    return %c0_i32, %arg1 : i32, i32
  }
  func.func @transform_3(%arg0: i32, %arg1: i32) -> (i32, i32) {
    %c0_i32 = arith.constant 0 : i32
    %c0_i32_0 = arith.constant 0 : i32
    return %arg1, %c0_i32 : i32, i32
  }
  func.func @transform_4(%arg0: i32, %arg1: i32) -> (i32, i32) {
    %c0_i32 = arith.constant 0 : i32
    %c0_i32_0 = arith.constant 0 : i32
    return %arg0, %c0_i32 : i32, i32
  }
}

</mosaic_0001>

<llo_original>
// kernel: mlp_forward.1
$region0: #{mlp_forward.1}
  #allocation0 [shape = 'u32[]', space=smem, size = 0x4, offset = 0x4, fixed_abs, tag = 'smem constant byte address 0x4 - core index']
  #allocation1 [shape = 'u32[144,128]{1,0:T(1,128)}', space=vmem, size = 0x12000, scoped, tag = 'internal scratch']
  #allocation2 [shape = 'f32[16,128]{1,0:T(8,128)}', space=vmem, size = 0x2000, scoped, tag = 'scratch operand']
  %s0 = inlined_call_operand.hbm [shape: f32[16,128], index: 0, kind: input, shape index: {}]
  %s1 = inlined_call_operand.hbm [shape: f32[128,512], index: 1, kind: input, shape index: {}]
  %s2 = inlined_call_operand.vmem [shape: f32[1,512], index: 2, kind: input, shape index: {}]
  %s3 = inlined_call_operand.hbm [shape: f32[512,128], index: 3, kind: input, shape index: {}]
  %s4 = inlined_call_operand.hbm [shape: f32[16,128], index: 4, kind: output, shape index: {}]
  %s5 = sld [smem:[#allocation0]]
  $region46: #{mlp_forward.1} parent=0
    _
  %s7 = ssub.s32 1, %s5
  %s8 = scalar_select 0, %s7, %s5
  $region1: #{mlp_forward.1} parent=0
    #allocation3 [shape = 'u8[8192]{0}', space=vmem, size = 0x2000, scoped, tag = 'input window, operand 0, single buffered']
    #allocation4 [shape = 's32[1]{0}', space=sflag, size = 0x4, scoped, tag = 'scoped memory for mlp_forward.1']
    #allocation5 [shape = 's32[1]{0}', space=sflag, size = 0x4, scoped, tag = 'scoped memory for mlp_forward.1']
    #allocation6 [shape = 'u8[262144]{0}', space=vmem, size = 0x40000, scoped, tag = 'input window, operand 1, single buffered']
    #allocation7 [shape = 's32[1]{0}', space=sflag, size = 0x4, scoped, tag = 'scoped memory for mlp_forward.1']
    #allocation8 [shape = 'u8[262144]{0}', space=vmem, size = 0x40000, scoped, tag = 'input window, operand 3, single buffered']
    #allocation9 [shape = 'u8[8192]{0}', space=vmem, size = 0x2000, scoped, tag = 'output window, operand 0, single buffered']
    %9 = vsyncpa [#allocation4], 0
    %10 = vsyncpa [#allocation7], 0
    %11 = vsyncpa [#allocation5], 0
    // Predicated region
    $region2: #{mlp_forward.1} parent=1 // pred_check
      _
    $region3: #{mlp_forward.1} parent=1 // pred_check_branch
      %13 = sbr.rel (0) target = $region5
    $region4: #{mlp_forward.1} parent=1 // pred_region
      %s15 = ssub.s32 256, 256
      %16 = vsyncadd [#allocation4], %s15
      %s17 = sshll.u32 [#allocation3], 4
      %s18 = int_to_ptr.vmem [resolvable:$true] %s17
      %23 = dma.hbm_to_vmem [thread:$0]  %s0, 256, %s18, [#allocation4], 128, 128, 8
    $region5: #{mlp_forward.1} parent=1 // pred_fallthru
      _
    // Predicated region
    $region6: #{mlp_forward.1} parent=1 // pred_check
      _
    $region7: #{mlp_forward.1} parent=1 // pred_check_branch
      %25 = sbr.rel (0) target = $region9
    $region8: #{mlp_forward.1} parent=1 // pred_region
      %s27 = ssub.s32 8192, 8192
      %28 = vsyncadd [#allocation7], %s27
      %s29 = sshll.u32 [#allocation6], 4
      %s30 = int_to_ptr.vmem [resolvable:$true] %s29
      %35 = dma.hbm_to_vmem [thread:$0]  %s1, 8192, %s30, [#allocation7], 512, 512, 32
    $region9: #{mlp_forward.1} parent=1 // pred_fallthru
      _
    // Predicated region
    $region10: #{mlp_forward.1} parent=1 // pred_check
      _
    $region11: #{mlp_forward.1} parent=1 // pred_check_branch
      %37 = sbr.rel (0) target = $region13
    $region12: #{mlp_forward.1} parent=1 // pred_region
      _
    $region13: #{mlp_forward.1} parent=1 // pred_fallthru
      _
    // Predicated region
    $region14: #{mlp_forward.1} parent=1 // pred_check
      _
    $region15: #{mlp_forward.1} parent=1 // pred_check_branch
      %39 = sbr.rel (0) target = $region17
    $region16: #{mlp_forward.1} parent=1 // pred_region
      %s41 = ssub.s32 8192, 8192
      %42 = vsyncadd [#allocation7], %s41
      %s43 = sshll.u32 [#allocation8], 4
      %s44 = int_to_ptr.vmem [resolvable:$true] %s43
      %49 = dma.hbm_to_vmem [thread:$0]  %s3, 8192, %s44, [#allocation7], 128, 128, 8
    $region17: #{mlp_forward.1} parent=1 // pred_fallthru
      _
    // Predicated region
    $region18: #{mlp_forward.1} parent=1 // pred_check
      _
    $region19: #{mlp_forward.1} parent=1 // pred_check_branch
      %51 = sbr.rel (0) target = $region21
    $region20: #{mlp_forward.1} parent=1 // pred_region
      %52 = dma.done [#allocation4], 256
    $region21: #{mlp_forward.1} parent=1 // pred_fallthru
      _
    // Predicated region
    $region22: #{mlp_forward.1} parent=1 // pred_check
      _
    $region23: #{mlp_forward.1} parent=1 // pred_check_branch
      %54 = sbr.rel (0) target = $region25
    $region24: #{mlp_forward.1} parent=1 // pred_region
      %55 = dma.done [#allocation7], 8192
    $region25: #{mlp_forward.1} parent=1 // pred_fallthru
      _
    // Predicated region
    $region26: #{mlp_forward.1} parent=1 // pred_check
      _
    $region27: #{mlp_forward.1} parent=1 // pred_check_branch
      %57 = sbr.rel (0) target = $region29
    $region28: #{mlp_forward.1} parent=1 // pred_region
      %58 = dma.done [#allocation7], 8192
    $region29: #{mlp_forward.1} parent=1 // pred_fallthru
      _
    %p59 = scmp.eq.s32.totalorder 0, 0
    // Predicated region
    $region30: #{mlp_forward.1} parent=1 // pred_check
      %p60 = pneg %p59
    $region31: #{mlp_forward.1} parent=1 // pred_check_branch
      %62 = sbr.rel (%p60) target = $region33
    $region32: #{mlp_forward.1} parent=1 // pred_region
      %63 = vst [vmem:[#allocation2] sm:$0xff] 0.0
      %64 = vst [vmem:[#allocation2 + $0x8] sm:$0xff] 0.0
    $region33: #{mlp_forward.1} parent=1 // pred_fallthru
      _
    %v65 = vld [vmem:[#allocation3] sm:$0xff]
    %v66 = vld [vmem:[#allocation3 + $0x8] sm:$0xff]
    %v67 = vld [vmem:[#allocation6] sm:$0xff]
    %v68 = vld [vmem:[#allocation6 + $0x8] sm:$0xff]
    %v69 = vld [vmem:[#allocation6 + $0x10] sm:$0xff]
    %v70 = vld [vmem:[#allocation6 + $0x18] sm:$0xff]
    %v71 = vld [vmem:[#allocation6 + $0x20] sm:$0xff]
    %v72 = vld [vmem:[#allocation6 + $0x28] sm:$0xff]
    %v73 = vld [vmem:[#allocation6 + $0x30] sm:$0xff]
    %v74 = vld [vmem:[#allocation6 + $0x38] sm:$0xff]
    %v75 = vld [vmem:[#allocation6 + $0x40] sm:$0xff]
    %v76 = vld [vmem:[#allocation6 + $0x48] sm:$0xff]
    %v77 = vld [vmem:[#allocation6 + $0x50] sm:$0xff]
    %v78 = vld [vmem:[#allocation6 + $0x58] sm:$0xff]
    %v79 = vld [vmem:[#allocation6 + $0x60] sm:$0xff]
    %v80 = vld [vmem:[#allocation6 + $0x68] sm:$0xff]
    %v81 = vld [vmem:[#allocation6 + $0x70] sm:$0xff]
    %v82 = vld [vmem:[#allocation6 + $0x78] sm:$0xff]
    %v83 = vld [vmem:[#allocation6 + $0x80] sm:$0xff]
    %v84 = vld [vmem:[#allocation6 + $0x88] sm:$0xff]
    %v85 = vld [vmem:[#allocation6 + $0x90] sm:$0xff]
    %v86 = vld [vmem:[#allocation6 + $0x98] sm:$0xff]
    %v87 = vld [vmem:[#allocation6 + $0xa0] sm:$0xff]
    %v88 = vld [vmem:[#allocation6 + $0xa8] sm:$0xff]
    %v89 = vld [vmem:[#allocation6 + $0xb0] sm:$0xff]
    %v90 = vld [vmem:[#allocation6 + $0xb8] sm:$0xff]
    %v91 = vld [vmem:[#allocation6 + $0xc0] sm:$0xff]
    %v92 = vld [vmem:[#allocation6 + $0xc8] sm:$0xff]
    %v93 = vld [vmem:[#allocation6 + $0xd0] sm:$0xff]
    %v94 = vld [vmem:[#allocation6 + $0xd8] sm:$0xff]
    %v95 = vld [vmem:[#allocation6 + $0xe0] sm:$0xff]
    %v96 = vld [vmem:[#allocation6 + $0xe8] sm:$0xff]
    %v97 = vld [vmem:[#allocation6 + $0xf0] sm:$0xff]
    %v98 = vld [vmem:[#allocation6 + $0xf8] sm:$0xff]
    %v99 = vld [vmem:[#allocation6 + $0x100] sm:$0xff]
    %v100 = vld [vmem:[#allocation6 + $0x108] sm:$0xff]
    %v101 = vld [vmem:[#allocation6 + $0x110] sm:$0xff]
    %v102 = vld [vmem:[#allocation6 + $0x118] sm:$0xff]
    %v103 = vld [vmem:[#allocation6 + $0x120] sm:$0xff]
    %v104 = vld [vmem:[#allocation6 + $0x128] sm:$0xff]
    %v105 = vld [vmem:[#allocation6 + $0x130] sm:$0xff]
    %v106 = vld [vmem:[#allocation6 + $0x138] sm:$0xff]
    %v107 = vld [vmem:[#allocation6 + $0x140] sm:$0xff]
    %v108 = vld [vmem:[#allocation6 + $0x148] sm:$0xff]
    %v109 = vld [vmem:[#allocation6 + $0x150] sm:$0xff]
    %v110 = vld [vmem:[#allocation6 + $0x158] sm:$0xff]
    %v111 = vld [vmem:[#allocation6 + $0x160] sm:$0xff]
    %v112 = vld [vmem:[#allocation6 + $0x168] sm:$0xff]
    %v113 = vld [vmem:[#allocation6 + $0x170] sm:$0xff]
    %v114 = vld [vmem:[#allocation6 + $0x178] sm:$0xff]
    %v115 = vld [vmem:[#allocation6 + $0x180] sm:$0xff]
    %v116 = vld [vmem:[#allocation6 + $0x188] sm:$0xff]
    %v117 = vld [vmem:[#allocation6 + $0x190] sm:$0xff]
    %v118 = vld [vmem:[#allocation6 + $0x198] sm:$0xff]
    %v119 = vld [vmem:[#allocation6 + $0x1a0] sm:$0xff]
    %v120 = vld [vmem:[#allocation6 + $0x1a8] sm:$0xff]
    %v121 = vld [vmem:[#allocation6 + $0x1b0] sm:$0xff]
    %v122 = vld [vmem:[#allocation6 + $0x1b8] sm:$0xff]
    %v123 = vld [vmem:[#allocation6 + $0x1c0] sm:$0xff]
    %v124 = vld [vmem:[#allocation6 + $0x1c8] sm:$0xff]
    %v125 = vld [vmem:[#allocation6 + $0x1d0] sm:$0xff]
    %v126 = vld [vmem:[#allocation6 + $0x1d8] sm:$0xff]
    %v127 = vld [vmem:[#allocation6 + $0x1e0] sm:$0xff]
    %v128 = vld [vmem:[#allocation6 + $0x1e8] sm:$0xff]
    %v129 = vld [vmem:[#allocation6 + $0x1f0] sm:$0xff]
    %v130 = vld [vmem:[#allocation6 + $0x1f8] sm:$0xff]
    %v131 = vld [vmem:[%s2] sm:$0xf]
    %v133 = vlaneseq
    %v134 = vshrl.u32 %v133, 7
    %v135 = vsub.s32 0, %v134
    %v136 = vrot.slane %v131, %v135
    %v137 = vlaneseq
    %v138 = vshrl.u32 %v137, 7
    %v139 = vsub.s32 1, %v138
    %v140 = vrot.slane %v131, %v139
    %v141 = vlaneseq
    %v142 = vshrl.u32 %v141, 7
    %v143 = vsub.s32 2, %v142
    %v144 = vrot.slane %v131, %v143
    %v145 = vlaneseq
    %v146 = vshrl.u32 %v145, 7
    %v147 = vsub.s32 3, %v146
    %v148 = vrot.slane %v131, %v147
    %153 = vmatprep.subr.mxu0 %v68
    %154 = vmatpush1.msra.mxu0 %v67
    %155 = vmatprep.subr.mxu0 %v72
    %156 = vmatpush1.msra.mxu0 %v71
    %157 = vmatprep.subr.mxu0 %v76
    %158 = vmatpush1.msra.mxu0 %v75
    %159 = vmatprep.subr.mxu0 %v80
    %160 = vmatpush1.msra.mxu0 %v79
    %161 = vmatprep.subr.mxu0 %v84
    %162 = vmatpush1.msra.mxu0 %v83
    %163 = vmatprep.subr.mxu0 %v88
    %164 = vmatpush1.msra.mxu0 %v87
    %165 = vmatprep.subr.mxu0 %v92
    %166 = vmatpush1.msra.mxu0 %v91
    %167 = vmatprep.subr.mxu0 %v96
    %168 = vmatpush1.msra.mxu0 %v95
    %169 = vmatprep.subr.mxu0 %v100
    %170 = vmatpush1.msra.mxu0 %v99
    %171 = vmatprep.subr.mxu0 %v104
    %172 = vmatpush1.msra.mxu0 %v103
    %173 = vmatprep.subr.mxu0 %v108
    %174 = vmatpush1.msra.mxu0 %v107
    %175 = vmatprep.subr.mxu0 %v112
    %176 = vmatpush1.msra.mxu0 %v111
    %177 = vmatprep.subr.mxu0 %v116
    %178 = vmatpush1.msra.mxu0 %v115
    %179 = vmatprep.subr.mxu0 %v120
    %180 = vmatpush1.msra.mxu0 %v119
    %181 = vmatprep.subr.mxu0 %v124
    %182 = vmatpush1.msra.mxu0 %v123
    %183 = vmatprep.subr.mxu0 %v128
    %184 = vmatpush1.msra.mxu0 %v127
    %185 = vmatprep.subr.mxu0 0.0
    %186 = vmatpush1.msra.mxu0 0.0
    %187 = vmatprep.subr.mxu0 0.0
    %188 = vmatpush1.msra.mxu0 0.0
    %189 = vmatprep.subr.mxu0 0.0
    %190 = vmatpush1.msra.mxu0 0.0
    %191 = vmatprep.subr.mxu0 0.0
    %192 = vmatpush1.msra.mxu0 0.0
    %193 = vmatprep.subr.mxu0 0.0
    %194 = vmatpush1.msra.mxu0 0.0
    %195 = vmatprep.subr.mxu0 0.0
    %196 = vmatpush1.msra.mxu0 0.0
    %197 = vmatprep.subr.mxu0 0.0
    %198 = vmatpush1.msra.mxu0 0.0
    %199 = vmatprep.subr.mxu0 0.0
    %200 = vmatpush1.msra.mxu0 0.0
    %201 = vmatprep.subr.mxu0 0.0
    %202 = vmatpush1.msra.mxu0 0.0
    %203 = vmatprep.subr.mxu0 0.0
    %204 = vmatpush1.msra.mxu0 0.0
    %205 = vmatprep.subr.mxu0 0.0
    %206 = vmatpush1.msra.mxu0 0.0
    %207 = vmatprep.subr.mxu0 0.0
    %208 = vmatpush1.msra.mxu0 0.0
    %209 = vmatprep.subr.mxu0 0.0
    %210 = vmatpush1.msra.mxu0 0.0
    %211 = vmatprep.subr.mxu0 0.0
    %212 = vmatpush1.msra.mxu0 0.0
    %213 = vmatprep.subr.mxu0 0.0
    %214 = vmatpush1.msra.mxu0 0.0
    %215 = vmatprep.subr.mxu0 0.0
    %216 = vmatpush1.msra.mxu0 0.0
    %217 = vmatprep.mubr.f32.mxu0 0.0
    %218 = vmatmul.mubr.f32.gmra.mrb[0].mxu0 %v65
    %v219 = vpop.f32.mrb[0].mxu0
    %v220 = vadd.f32 %v136, %v219
    %v221 = vpop.f32.mrb[0].mxu0
    %v222 = vadd.f32 %v140, %v221
    %223 = vmatprep.mubr.f32.mxu0 0.0
    %224 = vmatmul.mubr.f32.gmra.mrb[0].mxu0 %v66
    %v225 = vpop.f32.mrb[0].mxu0
    %v226 = vadd.f32 %v136, %v225
    %v227 = vpop.f32.mrb[0].mxu0
    %v228 = vadd.f32 %v140, %v227
    %229 = vdwg.mxu0
    %230 = vmatprep.subr.mxu0 %v70
    %231 = vmatpush1.msra.mxu0 %v69
    %232 = vmatprep.subr.mxu0 %v74
    %233 = vmatpush1.msra.mxu0 %v73
    %234 = vmatprep.subr.mxu0 %v78
    %235 = vmatpush1.msra.mxu0 %v77
    %236 = vmatprep.subr.mxu0 %v82
    %237 = vmatpush1.msra.mxu0 %v81
    %238 = vmatprep.subr.mxu0 %v86
    %239 = vmatpush1.msra.mxu0 %v85
    %240 = vmatprep.subr.mxu0 %v90
    %241 = vmatpush1.msra.mxu0 %v89
    %242 = vmatprep.subr.mxu0 %v94
    %243 = vmatpush1.msra.mxu0 %v93
    %244 = vmatprep.subr.mxu0 %v98
    %245 = vmatpush1.msra.mxu0 %v97
    %246 = vmatprep.subr.mxu0 %v102
    %247 = vmatpush1.msra.mxu0 %v101
    %248 = vmatprep.subr.mxu0 %v106
    %249 = vmatpush1.msra.mxu0 %v105
    %250 = vmatprep.subr.mxu0 %v110
    %251 = vmatpush1.msra.mxu0 %v109
    %252 = vmatprep.subr.mxu0 %v114
    %253 = vmatpush1.msra.mxu0 %v113
    %254 = vmatprep.subr.mxu0 %v118
    %255 = vmatpush1.msra.mxu0 %v117
    %256 = vmatprep.subr.mxu0 %v122
    %257 = vmatpush1.msra.mxu0 %v121
    %258 = vmatprep.subr.mxu0 %v126
    %259 = vmatpush1.msra.mxu0 %v125
    %260 = vmatprep.subr.mxu0 %v130
    %261 = vmatpush1.msra.mxu0 %v129
    %262 = vmatprep.subr.mxu0 0.0
    %263 = vmatpush1.msra.mxu0 0.0
    %264 = vmatprep.subr.mxu0 0.0
    %265 = vmatpush1.msra.mxu0 0.0
    %266 = vmatprep.subr.mxu0 0.0
    %267 = vmatpush1.msra.mxu0 0.0
    %268 = vmatprep.subr.mxu0 0.0
    %269 = vmatpush1.msra.mxu0 0.0
    %270 = vmatprep.subr.mxu0 0.0
    %271 = vmatpush1.msra.mxu0 0.0
    %272 = vmatprep.subr.mxu0 0.0
    %273 = vmatpush1.msra.mxu0 0.0
    %274 = vmatprep.subr.mxu0 0.0
    %275 = vmatpush1.msra.mxu0 0.0
    %276 = vmatprep.subr.mxu0 0.0
    %277 = vmatpush1.msra.mxu0 0.0
    %278 = vmatprep.subr.mxu0 0.0
    %279 = vmatpush1.msra.mxu0 0.0
    %280 = vmatprep.subr.mxu0 0.0
    %281 = vmatpush1.msra.mxu0 0.0
    %282 = vmatprep.subr.mxu0 0.0
    %283 = vmatpush1.msra.mxu0 0.0
    %284 = vmatprep.subr.mxu0 0.0
    %285 = vmatpush1.msra.mxu0 0.0
    %286 = vmatprep.subr.mxu0 0.0
    %287 = vmatpush1.msra.mxu0 0.0
    %288 = vmatprep.subr.mxu0 0.0
    %289 = vmatpush1.msra.mxu0 0.0
    %290 = vmatprep.subr.mxu0 0.0
    %291 = vmatpush1.msra.mxu0 0.0
    %292 = vmatprep.subr.mxu0 0.0
    %293 = vmatpush1.msra.mxu0 0.0
    %294 = vmatprep.mubr.f32.mxu0 0.0
    %295 = vmatmul.mubr.f32.gmra.mrb[0].mxu0 %v65
    %v296 = vpop.f32.mrb[0].mxu0
    %v297 = vadd.f32 %v144, %v296
    %v298 = vpop.f32.mrb[0].mxu0
    %v299 = vadd.f32 %v148, %v298
    %300 = vmatprep.mubr.f32.mxu0 0.0
    %301 = vmatmul.mubr.f32.gmra.mrb[0].mxu0 %v66
    %v302 = vpop.f32.mrb[0].mxu0
    %v303 = vadd.f32 %v144, %v302
    %v304 = vpop.f32.mrb[0].mxu0
    %v305 = vadd.f32 %v148, %v304
    %306 = vdwg.mxu0
    %v307 = vmax.f32 %v220, 0.0
    %v308 = vmax.f32 %v222, 0.0
    %v309 = vmax.f32 %v297, 0.0
    %v310 = vmax.f32 %v299, 0.0
    %v311 = vmax.f32 %v226, 0.0
    %v312 = vmax.f32 %v228, 0.0
    %v313 = vmax.f32 %v303, 0.0
    %v314 = vmax.f32 %v305, 0.0
    %v315 = vld [vmem:[#allocation2] sm:$0xff]
    %v316 = vld [vmem:[#allocation2 + $0x8] sm:$0xff]
    %v317 = vld [vmem:[#allocation8] sm:$0xff]
    %v318 = vld [vmem:[#allocation8 + $0x8] sm:$0xff]
    %v319 = vld [vmem:[#allocation8 + $0x10] sm:$0xff]
    %v320 = vld [vmem:[#allocation8 + $0x18] sm:$0xff]
    %v321 = vld [vmem:[#allocation8 + $0x20] sm:$0xff]
    %v322 = vld [vmem:[#allocation8 + $0x28] sm:$0xff]
    %v323 = vld [vmem:[#allocation8 + $0x30] sm:$0xff]
    %v324 = vld [vmem:[#allocation8 + $0x38] sm:$0xff]
    %v325 = vld [vmem:[#allocation8 + $0x40] sm:$0xff]
    %v326 = vld [vmem:[#allocation8 + $0x48] sm:$0xff]
    %v327 = vld [vmem:[#allocation8 + $0x50] sm:$0xff]
    %v328 = vld [vmem:[#allocation8 + $0x58] sm:$0xff]
    %v329 = vld [vmem:[#allocation8 + $0x60] sm:$0xff]
    %v330 = vld [vmem:[#allocation8 + $0x68] sm:$0xff]
    %v331 = vld [vmem:[#allocation8 + $0x70] sm:$0xff]
    %v332 = vld [vmem:[#allocation8 + $0x78] sm:$0xff]
    %v333 = vld [vmem:[#allocation8 + $0x80] sm:$0xff]
    %v334 = vld [vmem:[#allocation8 + $0x88] sm:$0xff]
    %v335 = vld [vmem:[#allocation8 + $0x90] sm:$0xff]
    %v336 = vld [vmem:[#allocation8 + $0x98] sm:$0xff]
    %v337 = vld [vmem:[#allocation8 + $0xa0] sm:$0xff]
    %v338 = vld [vmem:[#allocation8 + $0xa8] sm:$0xff]
    %v339 = vld [vmem:[#allocation8 + $0xb0] sm:$0xff]
    %v340 = vld [vmem:[#allocation8 + $0xb8] sm:$0xff]
    %v341 = vld [vmem:[#allocation8 + $0xc0] sm:$0xff]
    %v342 = vld [vmem:[#allocation8 + $0xc8] sm:$0xff]
    %v343 = vld [vmem:[#allocation8 + $0xd0] sm:$0xff]
    %v344 = vld [vmem:[#allocation8 + $0xd8] sm:$0xff]
    %v345 = vld [vmem:[#allocation8 + $0xe0] sm:$0xff]
    %v346 = vld [vmem:[#allocation8 + $0xe8] sm:$0xff]
    %v347 = vld [vmem:[#allocation8 + $0xf0] sm:$0xff]
    %v348 = vld [vmem:[#allocation8 + $0xf8] sm:$0xff]
    %v349 = vld [vmem:[#allocation8 + $0x100] sm:$0xff]
    %v350 = vld [vmem:[#allocation8 + $0x108] sm:$0xff]
    %v351 = vld [vmem:[#allocation8 + $0x110] sm:$0xff]
    %v352 = vld [vmem:[#allocation8 + $0x118] sm:$0xff]
    %v353 = vld [vmem:[#allocation8 + $0x120] sm:$0xff]
    %v354 = vld [vmem:[#allocation8 + $0x128] sm:$0xff]
    %v355 = vld [vmem:[#allocation8 + $0x130] sm:$0xff]
    %v356 = vld [vmem:[#allocation8 + $0x138] sm:$0xff]
    %v357 = vld [vmem:[#allocation8 + $0x140] sm:$0xff]
    %v358 = vld [vmem:[#allocation8 + $0x148] sm:$0xff]
    %v359 = vld [vmem:[#allocation8 + $0x150] sm:$0xff]
    %v360 = vld [vmem:[#allocation8 + $0x158] sm:$0xff]
    %v361 = vld [vmem:[#allocation8 + $0x160] sm:$0xff]
    %v362 = vld [vmem:[#allocation8 + $0x168] sm:$0xff]
    %v363 = vld [vmem:[#allocation8 + $0x170] sm:$0xff]
    %v364 = vld [vmem:[#allocation8 + $0x178] sm:$0xff]
    %v365 = vld [vmem:[#allocation8 + $0x180] sm:$0xff]
    %v366 = vld [vmem:[#allocation8 + $0x188] sm:$0xff]
    %v367 = vld [vmem:[#allocation8 + $0x190] sm:$0xff]
    %v368 = vld [vmem:[#allocation8 + $0x198] sm:$0xff]
    %v369 = vld [vmem:[#allocation8 + $0x1a0] sm:$0xff]
    %v370 = vld [vmem:[#allocation8 + $0x1a8] sm:$0xff]
    %v371 = vld [vmem:[#allocation8 + $0x1b0] sm:$0xff]
    %v372 = vld [vmem:[#allocation8 + $0x1b8] sm:$0xff]
    %v373 = vld [vmem:[#allocation8 + $0x1c0] sm:$0xff]
    %v374 = vld [vmem:[#allocation8 + $0x1c8] sm:$0xff]
    %v375 = vld [vmem:[#allocation8 + $0x1d0] sm:$0xff]
    %v376 = vld [vmem:[#allocation8 + $0x1d8] sm:$0xff]
    %v377 = vld [vmem:[#allocation8 + $0x1e0] sm:$0xff]
    %v378 = vld [vmem:[#allocation8 + $0x1e8] sm:$0xff]
    %v379 = vld [vmem:[#allocation8 + $0x1f0] sm:$0xff]
    %v380 = vld [vmem:[#allocation8 + $0x1f8] sm:$0xff]
    %381 = vmatprep.subr.mxu0 0.0
    %382 = vmatpush1.msra.mxu0 %v317
    %383 = vmatprep.subr.mxu0 0.0
    %384 = vmatpush1.msra.mxu0 %v318
    %385 = vmatprep.subr.mxu0 0.0
    %386 = vmatpush1.msra.mxu0 %v319
    %387 = vmatprep.subr.mxu0 0.0
    %388 = vmatpush1.msra.mxu0 %v320
    %389 = vmatprep.subr.mxu0 0.0
    %390 = vmatpush1.msra.mxu0 %v321
    %391 = vmatprep.subr.mxu0 0.0
    %392 = vmatpush1.msra.mxu0 %v322
    %393 = vmatprep.subr.mxu0 0.0
    %394 = vmatpush1.msra.mxu0 %v323
    %395 = vmatprep.subr.mxu0 0.0
    %396 = vmatpush1.msra.mxu0 %v324
    %397 = vmatprep.subr.mxu0 0.0
    %398 = vmatpush1.msra.mxu0 %v325
    %399 = vmatprep.subr.mxu0 0.0
    %400 = vmatpush1.msra.mxu0 %v326
    %401 = vmatprep.subr.mxu0 0.0
    %402 = vmatpush1.msra.mxu0 %v327
    %403 = vmatprep.subr.mxu0 0.0
    %404 = vmatpush1.msra.mxu0 %v328
    %405 = vmatprep.subr.mxu0 0.0
    %406 = vmatpush1.msra.mxu0 %v329
    %407 = vmatprep.subr.mxu0 0.0
    %408 = vmatpush1.msra.mxu0 %v330
    %409 = vmatprep.subr.mxu0 0.0
    %410 = vmatpush1.msra.mxu0 %v331
    %411 = vmatprep.subr.mxu0 0.0
    %412 = vmatpush1.msra.mxu0 %v332
    %413 = vmatprep.subr.mxu0 0.0
    %414 = vmatpush1.msra.mxu0 %v333
    %415 = vmatprep.subr.mxu0 0.0
    %416 = vmatpush1.msra.mxu0 %v334
    %417 = vmatprep.subr.mxu0 0.0
    %418 = vmatpush1.msra.mxu0 %v335
    %419 = vmatprep.subr.mxu0 0.0
    %420 = vmatpush1.msra.mxu0 %v336
    %421 = vmatprep.subr.mxu0 0.0
    %422 = vmatpush1.msra.mxu0 %v337
    %423 = vmatprep.subr.mxu0 0.0
    %424 = vmatpush1.msra.mxu0 %v338
    %425 = vmatprep.subr.mxu0 0.0
    %426 = vmatpush1.msra.mxu0 %v339
    %427 = vmatprep.subr.mxu0 0.0
    %428 = vmatpush1.msra.mxu0 %v340
    %429 = vmatprep.subr.mxu0 0.0
    %430 = vmatpush1.msra.mxu0 %v341
    %431 = vmatprep.subr.mxu0 0.0
    %432 = vmatpush1.msra.mxu0 %v342
    %433 = vmatprep.subr.mxu0 0.0
    %434 = vmatpush1.msra.mxu0 %v343
    %435 = vmatprep.subr.mxu0 0.0
    %436 = vmatpush1.msra.mxu0 %v344
    %437 = vmatprep.subr.mxu0 0.0
    %438 = vmatpush1.msra.mxu0 %v345
    %439 = vmatprep.subr.mxu0 0.0
    %440 = vmatpush1.msra.mxu0 %v346
    %441 = vmatprep.subr.mxu0 0.0
    %442 = vmatpush1.msra.mxu0 %v347
    %443 = vmatprep.subr.mxu0 0.0
    %444 = vmatpush1.msra.mxu0 %v348
    %445 = vmatprep.mubr.f32.mxu0 %v308
    %446 = vmatmul.mubr.f32.gmra.mrb[0].mxu0 %v307
    %v447 = vpop.f32.mrb[0].mxu0
    %v448 = vadd.f32 0.0, %v447
    %v449 = vpop.f32.mrb[0].mxu0
    %450 = vmatprep.mubr.f32.mxu0 %v312
    %451 = vmatmul.mubr.f32.gmra.mrb[0].mxu0 %v311
    %v452 = vpop.f32.mrb[0].mxu0
    %v453 = vadd.f32 0.0, %v452
    %v454 = vpop.f32.mrb[0].mxu0
    %455 = vdwg.mxu0
    %456 = vmatprep.subr.mxu0 0.0
    %457 = vmatpush1.msra.mxu0 %v349
    %458 = vmatprep.subr.mxu0 0.0
    %459 = vmatpush1.msra.mxu0 %v350
    %460 = vmatprep.subr.mxu0 0.0
    %461 = vmatpush1.msra.mxu0 %v351
    %462 = vmatprep.subr.mxu0 0.0
    %463 = vmatpush1.msra.mxu0 %v352
    %464 = vmatprep.subr.mxu0 0.0
    %465 = vmatpush1.msra.mxu0 %v353
    %466 = vmatprep.subr.mxu0 0.0
    %467 = vmatpush1.msra.mxu0 %v354
    %468 = vmatprep.subr.mxu0 0.0
    %469 = vmatpush1.msra.mxu0 %v355
    %470 = vmatprep.subr.mxu0 0.0
    %471 = vmatpush1.msra.mxu0 %v356
    %472 = vmatprep.subr.mxu0 0.0
    %473 = vmatpush1.msra.mxu0 %v357
    %474 = vmatprep.subr.mxu0 0.0
    %475 = vmatpush1.msra.mxu0 %v358
    %476 = vmatprep.subr.mxu0 0.0
    %477 = vmatpush1.msra.mxu0 %v359
    %478 = vmatprep.subr.mxu0 0.0
    %479 = vmatpush1.msra.mxu0 %v360
    %480 = vmatprep.subr.mxu0 0.0
    %481 = vmatpush1.msra.mxu0 %v361
    %482 = vmatprep.subr.mxu0 0.0
    %483 = vmatpush1.msra.mxu0 %v362
    %484 = vmatprep.subr.mxu0 0.0
    %485 = vmatpush1.msra.mxu0 %v363
    %486 = vmatprep.subr.mxu0 0.0
    %487 = vmatpush1.msra.mxu0 %v364
    %488 = vmatprep.subr.mxu0 0.0
    %489 = vmatpush1.msra.mxu0 %v365
    %490 = vmatprep.subr.mxu0 0.0
    %491 = vmatpush1.msra.mxu0 %v366
    %492 = vmatprep.subr.mxu0 0.0
    %493 = vmatpush1.msra.mxu0 %v367
    %494 = vmatprep.subr.mxu0 0.0
    %495 = vmatpush1.msra.mxu0 %v368
    %496 = vmatprep.subr.mxu0 0.0
    %497 = vmatpush1.msra.mxu0 %v369
    %498 = vmatprep.subr.mxu0 0.0
    %499 = vmatpush1.msra.mxu0 %v370
    %500 = vmatprep.subr.mxu0 0.0
    %501 = vmatpush1.msra.mxu0 %v371
    %502 = vmatprep.subr.mxu0 0.0
    %503 = vmatpush1.msra.mxu0 %v372
    %504 = vmatprep.subr.mxu0 0.0
    %505 = vmatpush1.msra.mxu0 %v373
    %506 = vmatprep.subr.mxu0 0.0
    %507 = vmatpush1.msra.mxu0 %v374
    %508 = vmatprep.subr.mxu0 0.0
    %509 = vmatpush1.msra.mxu0 %v375
    %510 = vmatprep.subr.mxu0 0.0
    %511 = vmatpush1.msra.mxu0 %v376
    %512 = vmatprep.subr.mxu0 0.0
    %513 = vmatpush1.msra.mxu0 %v377
    %514 = vmatprep.subr.mxu0 0.0
    %515 = vmatpush1.msra.mxu0 %v378
    %516 = vmatprep.subr.mxu0 0.0
    %517 = vmatpush1.msra.mxu0 %v379
    %518 = vmatprep.subr.mxu0 0.0
    %519 = vmatpush1.msra.mxu0 %v380
    %520 = vmatprep.mubr.f32.mxu0 %v310
    %521 = vmatmul.mubr.f32.gmra.mrb[0].mxu0 %v309
    %v522 = vpop.f32.mrb[0].mxu0
    %v523 = vadd.f32 %v448, %v522
    %v524 = vpop.f32.mrb[0].mxu0
    %525 = vmatprep.mubr.f32.mxu0 %v314
    %526 = vmatmul.mubr.f32.gmra.mrb[0].mxu0 %v313
    %v527 = vpop.f32.mrb[0].mxu0
    %v528 = vadd.f32 %v453, %v527
    %v529 = vpop.f32.mrb[0].mxu0
    %530 = vdwg.mxu0
    %v531 = vadd.f32 %v315, %v523
    %v532 = vadd.f32 %v316, %v528
    %533 = vst [vmem:[#allocation2] sm:$0xff] %v531
    %534 = vst [vmem:[#allocation2 + $0x8] sm:$0xff] %v532
    // Predicated region
    $region34: #{mlp_forward.1} parent=1 // pred_check
      %p535 = pneg %p59
    $region35: #{mlp_forward.1} parent=1 // pred_check_branch
      %537 = sbr.rel (%p535) target = $region37
    $region36: #{mlp_forward.1} parent=1 // pred_region
      %v538 = vld [vmem:[#allocation2] sm:$0xff]
      %v539 = vld [vmem:[#allocation2 + $0x8] sm:$0xff]
      %540 = vst [vmem:[#allocation9] sm:$0xff] %v538
      %541 = vst [vmem:[#allocation9 + $0x8] sm:$0xff] %v539
    $region37: #{mlp_forward.1} parent=1 // pred_fallthru
      _
    // Predicated region
    $region38: #{mlp_forward.1} parent=1 // pred_check
      _
    $region39: #{mlp_forward.1} parent=1 // pred_check_branch
      %543 = sbr.rel (0) target = $region41
    $region40: #{mlp_forward.1} parent=1 // pred_region
      %s545 = ssub.s32 256, 256
      %546 = vsyncadd [#allocation5], %s545
      %s547 = sshll.u32 [#allocation9], 4
      %s548 = int_to_ptr.vmem [resolvable:$true] %s547
      %553 = dma.vmem_to_hbm [thread:$0]  %s548, 256, %s4, [#allocation5], 128, 128, 8
    $region41: #{mlp_forward.1} parent=1 // pred_fallthru
      _
    // Predicated region
    $region42: #{mlp_forward.1} parent=1 // pred_check
      _
    $region43: #{mlp_forward.1} parent=1 // pred_check_branch
      %555 = sbr.rel (0) target = $region45
    $region44: #{mlp_forward.1} parent=1 // pred_region
      %556 = dma.done [#allocation5], 256
    $region45: #{mlp_forward.1} parent=1 // pred_fallthru
      _
    %557 = vsyncpa [#allocation4], 1
    %558 = vsyncpa [#allocation7], 1
    %559 = vsyncpa [#allocation5], 1

</llo_original>
